<compile_context>
chip_gen: v7x
topology: tpu7x:2x2x1
jax: 0.10.0
libtpu: 0.0.40
codegen_flags: <defaults>
</compile_context>

<pallas_src>
import functools
import math

import jax
import jax.numpy as jnp
from jax import lax
from jax.experimental import pallas as pl
from jax.experimental.pallas import tpu as pltpu


# --------------------------------------------------------------------------- helpers

def _round_up(x, m):
    return ((x + m - 1) // m) * m


def _divisors(n):
    ds = set()
    i = 1
    while i * i <= n:
        if n % i == 0:
            ds.add(i)
            ds.add(n // i)
        i += 1
    return sorted(ds, reverse=True)


def _tile_candidates(dim, granule, cap):
    """Tile sizes for one dim, largest first. Prefers divisors of `dim` (no padding)."""
    cap = max(granule, cap)
    ts = [t for t in _divisors(dim) if t <= cap and (t % granule == 0 or t == dim)]
    if not ts:
        # No clean divisor: fall back to a granule-aligned tile and pad the array.
        ts = [max(granule, cap - cap % granule)]
    return ts


def _fake_quant(x, num_bits):
    """Uniform per-tensor min/max fake quantization (f32 in/out)."""
    qmax = float(2 ** num_bits - 1)
    x_min = jnp.min(x)
    x_max = jnp.max(x)
    scale = jnp.maximum((x_max - x_min) / qmax, 1e-8)
    q = jnp.clip(jnp.round((x - x_min) / scale), 0.0, qmax)
    return q * scale + x_min


# --------------------------------------------------------------------------- kernel

def _qbert_intermediate_kernel(x_ref, w_ref, b_ref, o_ref, *, precision, single_k):
    """One (i, j, k) grid step of out = GELU(x @ w + b).

    x_ref: (tm, tk) activation tile (pre-fake-quantized; bf16 when quantizing)
    w_ref: (tk, tn) pre-quantized weight tile ([H, I] layout -> canonical m,k x k,n)
    b_ref: (1, tn)  f32 bias tile
    o_ref: (tm, tn) f32 output tile; doubles as the accumulator across k
    """
    def dot(x, w):
        return lax.dot_general(x, w, (((1,), (0,)), ((), ())),
                               preferred_element_type=jnp.float32,
                               precision=precision)

    def gelu(y):
        # Exact GELU (torch.nn.GELU default): 0.5*y*(1+erf(y/sqrt(2))), f32 epilogue.
        return 0.5 * y * (1.0 + lax.erf(y * (1.0 / math.sqrt(2.0))))

    if single_k:
        # tk == H: no reduction axis; write the finished tile directly.
        y = dot(x_ref[...], w_ref[...]) + b_ref[...]
        o_ref[...] = gelu(y).astype(o_ref.dtype)
    else:
        k = pl.program_id(2)

        @pl.when(k == 0)
        def _init():
            o_ref[...] = jnp.zeros_like(o_ref)

        o_ref[...] += dot(x_ref[...], w_ref[...])

        @pl.when(k == pl.num_programs(2) - 1)
        def _finalize():
            y = o_ref[...] + b_ref[...]
            o_ref[...] = gelu(y).astype(o_ref.dtype)


# --------------------------------------------------------------------------- wrapper

# Double-buffered tile budget. Safe per-TC on v7x (64 MiB physical), leaves
# headroom for Mosaic internal scratch; comfortably within v5e/v6e's 128 MiB.
_VMEM_TILE_BUDGET = 40 * 1024 * 1024


def qbert_intermediate(hidden_states, weight, bias, num_bits, num_grad_bits,
                       *, tm_cap=1024):
    """Forward of QBertIntermediate: GELU(QLinear(hidden_states)).

    hidden_states: [B, S, H] f32; weight: [I, H] (torch layout); bias: [I].
    """
    del num_grad_bits  # backward-only gradient quantization; forward no-op
    num_bits = int(num_bits)
    B, S, H = hidden_states.shape
    I = weight.shape[0]
    M = B * S

    quantize = num_bits > 0

    x2d = hidden_states.reshape(M, H).astype(jnp.float32)
    w_t = weight.astype(jnp.float32).T        # [H, I]: one-time static transpose
    b = bias.astype(jnp.float32)

    if quantize:
        # Fake-quant hoisted out of the kernel (per-tensor stats need a global
        # pass anyway); quantized values streamed to the MXU as bf16.
        x2d = _fake_quant(x2d, num_bits).astype(jnp.bfloat16)
        w_t = _fake_quant(w_t, num_bits).astype(jnp.bfloat16)
        b = _fake_quant(b, num_bits + 8)
        precision = None
        # TODO(synk): optional int8 MXU affine-decomposition path for v5e/v6e
        # (not v7x, fp8-only MXU) once the kernel is compute-bound.
    else:
        # Full-precision QLinear path: f32 operands, explicit exact matmul.
        precision = lax.Precision.HIGHEST

    x_bytes = x2d.dtype.itemsize
    w_bytes = w_t.dtype.itemsize

    def need_bytes(tm, tn, tk):
        return 2 * (tm * tk * x_bytes + tk * tn * w_bytes + tn * 4 + tm * tn * 4)

    # Prefer tk == H (removes the reduction axis and K padding), then a
    # VMEM-resident weight stripe (tn == I), then the largest tm that fits.
    tm = tn = tk = None
    vmem_need = 0
    for tk_c in _tile_candidates(H, 128, H):
        for tn_c in _tile_candidates(I, 128, I):
            for tm_c in _tile_candidates(M, 8, tm_cap):
                need = need_bytes(tm_c, tn_c, tk_c)
                if need <= _VMEM_TILE_BUDGET:
                    tm, tn, tk, vmem_need = tm_c, tn_c, tk_c, need
                    break
            if tm is not None:
                break
        if tm is not None:
            break
    assert tm is not None, "no feasible tile plan"

    M_p, I_p, H_p = _round_up(M, tm), _round_up(I, tn), _round_up(H, tk)
    # Pad AFTER quantization so padded rows/cols are exact zeros (padded-K
    # columns of w kill any padded-x contribution; padded-I columns are sliced).
    if (M_p, H_p) != (M, H):
        x2d = jnp.pad(x2d, ((0, M_p - M), (0, H_p - H)))
    if (H_p, I_p) != (H, I):
        w_t = jnp.pad(w_t, ((0, H_p - H), (0, I_p - I)))
    b2d = (jnp.pad(b, (0, I_p - I)) if I_p != I else b).reshape(1, I_p)

    grid = (M_p // tm, I_p // tn, H_p // tk)
    single_k = grid[2] == 1

    kernel = functools.partial(_qbert_intermediate_kernel,
                               precision=precision, single_k=single_k)

    cost = pl.CostEstimate(
        flops=2 * M * H * I,
        transcendentals=M * I,
        bytes_accessed=x_bytes * M * H + w_bytes * H * I + 4 * I + 4 * M * I,
    )

    vmem_limit = max(32 * 1024 * 1024,
                     min(vmem_need + 4 * 1024 * 1024, 48 * 1024 * 1024))

    out = pl.pallas_call(
        kernel,
        out_shape=jax.ShapeDtypeStruct((M_p, I_p), jnp.float32),
        grid_spec=pltpu.PrefetchScalarGridSpec(
            num_scalar_prefetch=0,
            grid=grid,
            in_specs=[
                pl.BlockSpec((tm, tk), lambda i, j, k: (i, k)),   # x  [M, H]
                pl.BlockSpec((tk, tn), lambda i, j, k: (k, j)),   # w  [H, I]
                pl.BlockSpec((1, tn), lambda i, j, k: (0, j)),    # bias
            ],
            out_specs=pl.BlockSpec((tm, tn), lambda i, j, k: (i, j)),
        ),
        compiler_params=pltpu.CompilerParams(
            dimension_semantics=("parallel", "parallel", "arbitrary"),
            vmem_limit_bytes=vmem_limit,
        ),
        cost_estimate=cost,
    )(x2d, w_t, b2d)

    if (M_p, I_p) != (M, I):
        out = out[:M, :I]
    return out.reshape(B, S, I)


# --------------------------------------------------------------------------- reference

def _reference(hidden_states, weight, bias, num_bits):
    """Pure-JAX f32 reference for a sanity check."""
    x = hidden_states.astype(jnp.float32)
    w = weight.astype(jnp.float32)
    b = bias.astype(jnp.float32)
    if num_bits > 0:
        x = _fake_quant(x, num_bits)
        w = _fake_quant(w, num_bits)
        b = _fake_quant(b, num_bits + 8)
    y = jnp.einsum("bsh,ih->bsi", x, w,
                   precision=jax.lax.Precision.HIGHEST) + b
    return 0.5 * y * (1.0 + jax.lax.erf(y / math.sqrt(2.0)))


if __name__ == "__main__":
    # Small config consistent with a BERT intermediate: hidden=32, intermediate=128.
    B, S, H, I = 2, 8, 32, 128
    num_bits, num_grad_bits = 4, 4

    key = jax.random.PRNGKey(0)
    k_x, k_w, k_b = jax.random.split(key, 3)
    hidden_states = jax.random.normal(k_x, (B, S, H), dtype=jnp.float32)
    weight = jax.random.normal(k_w, (I, H), dtype=jnp.float32) * 0.02  # torch [out, in]
    bias = jax.random.normal(k_b, (I,), dtype=jnp.float32) * 0.02

    out = qbert_intermediate(hidden_states, weight, bias, num_bits, num_grad_bits)
    out = jax.block_until_ready(out)

    ref = _reference(hidden_states, weight, bias, num_bits)
    assert out.shape == (B, S, I)
    # bf16 MXU operands (carrying 4-bit fake-quant values) vs the f32 reference.
    assert jnp.allclose(out, ref, atol=2e-2, rtol=2e-2), "mismatch vs reference"

    print("KERNEL_OK")
</pallas_src>

<mosaic_0001>
module attributes {stable_mosaic.version = 11 : i64} {
  func.func @_qbert_intermediate_kernel(%arg0: i32, %arg1: i32, %arg2: i32, %arg3: memref<16x32xbf16, #tpu.memory_space<vmem>>, %arg4: memref<32x128xbf16, #tpu.memory_space<vmem>>, %arg5: memref<1x128xf32, #tpu.memory_space<vmem>>, %arg6: memref<16x128xf32, #tpu.memory_space<vmem>>) attributes {dimension_semantics = [#tpu.dimension_semantics<parallel>, #tpu.dimension_semantics<parallel>, #tpu.dimension_semantics<arbitrary>], iteration_bounds = array<i64: 1, 1, 1>, scalar_prefetch = 0 : i64, scratch_operands = 0 : i64, tpu.core_type = #tpu.core_type<tc>, window_params = [{transform_indices = @transform_0, window_bounds = array<i64: 16, 32>}, {transform_indices = @transform_1, window_bounds = array<i64: 32, 128>}, {transform_indices = @transform_2, window_bounds = array<i64: 1, 128>}, {transform_indices = @transform_3, window_bounds = array<i64: 16, 128>}]} {
    %c0 = arith.constant 0 : index
    %c0_0 = arith.constant 0 : index
    %0 = vector.load %arg3[%c0, %c0_0] : memref<16x32xbf16, #tpu.memory_space<vmem>>, vector<16x32xbf16>
    %c0_1 = arith.constant 0 : index
    %c0_2 = arith.constant 0 : index
    %1 = vector.load %arg4[%c0_1, %c0_2] : memref<32x128xbf16, #tpu.memory_space<vmem>>, vector<32x128xbf16>
    %cst = arith.constant dense<0.000000e+00> : vector<16x128xf32>
    %2 = tpu.matmul %0, %1, %cst {dimension_numbers = #tpu.dot_dimension_numbers<[1], [0], [0], [1], [0, 0, 1, 1], [], []>} : vector<16x32xbf16>, vector<32x128xbf16>, vector<16x128xf32> -> vector<16x128xf32>
    %c0_3 = arith.constant 0 : index
    %c0_4 = arith.constant 0 : index
    %3 = vector.load %arg5[%c0_3, %c0_4] : memref<1x128xf32, #tpu.memory_space<vmem>>, vector<1x128xf32>
    %4 = vector.broadcast %3 : vector<1x128xf32> to vector<16x128xf32>
    %5 = arith.addf %2, %4 : vector<16x128xf32>
    %cst_5 = arith.constant 5.000000e-01 : f32
    %6 = vector.broadcast %cst_5 : f32 to vector<16x128xf32>
    %7 = arith.mulf %6, %5 : vector<16x128xf32>
    %cst_6 = arith.constant 0.707106769 : f32
    %8 = vector.broadcast %cst_6 : f32 to vector<16x128xf32>
    %9 = arith.mulf %5, %8 : vector<16x128xf32>
    %10 = math.erf %9 : vector<16x128xf32>
    %cst_7 = arith.constant 1.000000e+00 : f32
    %11 = vector.broadcast %cst_7 : f32 to vector<16x128xf32>
    %12 = arith.addf %11, %10 : vector<16x128xf32>
    %13 = arith.mulf %7, %12 : vector<16x128xf32>
    %c0_8 = arith.constant 0 : index
    %c0_9 = arith.constant 0 : index
    %14 = vector.load %arg6[%c0_8, %c0_9] : memref<16x128xf32, #tpu.memory_space<vmem>>, vector<16x128xf32>
    tpu.vector_store %arg6[%c0_8, %c0_9], %13 {strides = array<i32>} : memref<16x128xf32, #tpu.memory_space<vmem>>, vector<16x128xf32>,
    return
  }
  func.func @transform_0(%arg0: i32, %arg1: i32, %arg2: i32) -> (i32, i32) {
    %c0_i32 = arith.constant 0 : i32
    return %arg0, %arg2 : i32, i32
  }
  func.func @transform_1(%arg0: i32, %arg1: i32, %arg2: i32) -> (i32, i32) {
    %c0_i32 = arith.constant 0 : i32
    return %arg2, %arg1 : i32, i32
  }
  func.func @transform_2(%arg0: i32, %arg1: i32, %arg2: i32) -> (i32, i32) {
    %c0_i32 = arith.constant 0 : i32
    %c0_i32_0 = arith.constant 0 : i32
    return %c0_i32, %arg1 : i32, i32
  }
  func.func @transform_3(%arg0: i32, %arg1: i32, %arg2: i32) -> (i32, i32) {
    %c0_i32 = arith.constant 0 : i32
    return %arg0, %arg1 : i32, i32
  }
}

</mosaic_0001>

<llo_original>
// kernel: tpu_custom_call.1
$region0: #{tpu_custom_call.1}
  #allocation0 [shape = 'u32[]', space=smem, size = 0x4, offset = 0x4, fixed_abs, tag = 'smem constant byte address 0x4 - core index']
  #allocation1 [shape = 'u32[144,128]{1,0:T(1,128)}', space=vmem, size = 0x12000, scoped, tag = 'internal scratch']
  %s0 = inlined_call_operand.hbm [shape: bf16[16,32], index: 0, kind: input, shape index: {}]
  %s1 = inlined_call_operand.hbm [shape: bf16[32,128], index: 1, kind: input, shape index: {}]
  %s2 = inlined_call_operand.vmem [shape: f32[1,128], index: 2, kind: input, shape index: {}]
  %s3 = inlined_call_operand.hbm [shape: f32[16,128], index: 3, kind: output, shape index: {}]
  %s4 = sld [smem:[#allocation0]]
  $region30: #{tpu_custom_call.1} parent=0
    _
  %s6 = ssub.s32 1, %s4
  %s7 = scalar_select 0, %s6, %s4
  $region1: #{tpu_custom_call.1} parent=0
    #allocation2 [shape = 'u8[4096]{0}', space=vmem, size = 0x1000, scoped, tag = 'input window, operand 0, single buffered']
    #allocation3 [shape = 's32[1]{0}', space=sflag, size = 0x4, scoped, tag = 'scoped memory for tpu_custom_call.1']
    #allocation4 [shape = 's32[1]{0}', space=sflag, size = 0x4, scoped, tag = 'scoped memory for tpu_custom_call.1']
    #allocation5 [shape = 'u8[8192]{0}', space=vmem, size = 0x2000, scoped, tag = 'input window, operand 1, single buffered']
    #allocation6 [shape = 's32[1]{0}', space=sflag, size = 0x4, scoped, tag = 'scoped memory for tpu_custom_call.1']
    #allocation7 [shape = 'u8[8192]{0}', space=vmem, size = 0x2000, scoped, tag = 'output window, operand 0, single buffered']
    %8 = vsyncpa [#allocation3], 0
    %9 = vsyncpa [#allocation6], 0
    %10 = vsyncpa [#allocation4], 0
    // Predicated region
    $region2: #{tpu_custom_call.1} parent=1 // pred_check
      _
    $region3: #{tpu_custom_call.1} parent=1 // pred_check_branch
      %12 = sbr.rel (0) target = $region5
    $region4: #{tpu_custom_call.1} parent=1 // pred_region
      %s14 = ssub.s32 128, 128
      %15 = vsyncadd [#allocation3], %s14
      %s16 = sshll.u32 [#allocation2], 4
      %s17 = int_to_ptr.vmem [resolvable:$true] %s16
      %22 = dma.hbm_to_vmem [thread:$0]  %s0, 128, %s17, [#allocation3], 64, 64, 4
    $region5: #{tpu_custom_call.1} parent=1 // pred_fallthru
      _
    // Predicated region
    $region6: #{tpu_custom_call.1} parent=1 // pred_check
      _
    $region7: #{tpu_custom_call.1} parent=1 // pred_check_branch
      %24 = sbr.rel (0) target = $region9
    $region8: #{tpu_custom_call.1} parent=1 // pred_region
      %s26 = ssub.s32 256, 256
      %27 = vsyncadd [#allocation6], %s26
      %s28 = sshll.u32 [#allocation5], 4
      %s29 = int_to_ptr.vmem [resolvable:$true] %s28
      %34 = dma.hbm_to_vmem [thread:$0]  %s1, 256, %s29, [#allocation6], 64, 64, 4
    $region9: #{tpu_custom_call.1} parent=1 // pred_fallthru
      _
    // Predicated region
    $region10: #{tpu_custom_call.1} parent=1 // pred_check
      _
    $region11: #{tpu_custom_call.1} parent=1 // pred_check_branch
      %36 = sbr.rel (0) target = $region13
    $region12: #{tpu_custom_call.1} parent=1 // pred_region
      _
    $region13: #{tpu_custom_call.1} parent=1 // pred_fallthru
      _
    // Predicated region
    $region14: #{tpu_custom_call.1} parent=1 // pred_check
      _
    $region15: #{tpu_custom_call.1} parent=1 // pred_check_branch
      %38 = sbr.rel (0) target = $region17
    $region16: #{tpu_custom_call.1} parent=1 // pred_region
      %39 = dma.done [#allocation3], 128
    $region17: #{tpu_custom_call.1} parent=1 // pred_fallthru
      _
    // Predicated region
    $region18: #{tpu_custom_call.1} parent=1 // pred_check
      _
    $region19: #{tpu_custom_call.1} parent=1 // pred_check_branch
      %41 = sbr.rel (0) target = $region21
    $region20: #{tpu_custom_call.1} parent=1 // pred_region
      %42 = dma.done [#allocation6], 256
    $region21: #{tpu_custom_call.1} parent=1 // pred_fallthru
      _
    %v44 = vld [vmem:[#allocation2] sm:$0xf]
    %v45 = vld [vmem:[#allocation2 + $0x4] sm:$0xf]
    %v46 = vld [vmem:[#allocation5] sm:$0xf]
    %v47 = vld [vmem:[#allocation5 + $0x4] sm:$0xf]
    %v48 = vld [vmem:[#allocation5 + $0x8] sm:$0xf]
    %v49 = vld [vmem:[#allocation5 + $0xc] sm:$0xf]
    %v50 = vld [vmem:[%s2] sm:$0x1]
    %v52 = vlaneseq
    %v53 = vshrl.u32 %v52, 7
    %v54 = vsub.s32 0, %v53
    %v55 = vrot.slane %v50, %v54
    %v59 = vunpack.c.l.b16 %v44
    %v60 = vunpack.c.l.b16 %v45
    %v61 = vpack.c.b16 %v60, %v59
    %v66 = vunpack.c.l.b16 %v46
    %v67 = vunpack.c.l.b16 %v47
    %v68 = vunpack.c.l.b16 %v48
    %v69 = vunpack.c.l.b16 %v49
    %v70 = vpack.c.b16 %v67, %v66
    %v71 = vpack.c.b16 %v69, %v68
    %vm74 = vcmask 261120
    %v76 = vsel %vm74, %v61, 0
    %78 = vmatprep.subr.bf16.mxu0 0
    %79 = vmatpush1.bf16.msra.mxu0 %v70
    %80 = vmatprep.subr.bf16.mxu0 0
    %81 = vmatpush1.bf16.msra.mxu0 %v71
    %82 = vmatprep.subr.bf16.mxu0 0
    %83 = vmatpush1.bf16.msra.mxu0 0
    %84 = vmatprep.subr.bf16.mxu0 0
    %85 = vmatpush1.bf16.msra.mxu0 0
    %86 = vmatprep.subr.bf16.mxu0 0
    %87 = vmatpush1.bf16.msra.mxu0 0
    %88 = vmatprep.subr.bf16.mxu0 0
    %89 = vmatpush1.bf16.msra.mxu0 0
    %90 = vmatprep.subr.bf16.mxu0 0
    %91 = vmatpush1.bf16.msra.mxu0 0
    %92 = vmatprep.subr.bf16.mxu0 0
    %93 = vmatpush1.bf16.msra.mxu0 0
    %94 = vmatprep.subr.bf16.mxu0 0
    %95 = vmatpush1.bf16.msra.mxu0 0
    %96 = vmatprep.subr.bf16.mxu0 0
    %97 = vmatpush1.bf16.msra.mxu0 0
    %98 = vmatprep.subr.bf16.mxu0 0
    %99 = vmatpush1.bf16.msra.mxu0 0
    %100 = vmatprep.subr.bf16.mxu0 0
    %101 = vmatpush1.bf16.msra.mxu0 0
    %102 = vmatprep.subr.bf16.mxu0 0
    %103 = vmatpush1.bf16.msra.mxu0 0
    %104 = vmatprep.subr.bf16.mxu0 0
    %105 = vmatpush1.bf16.msra.mxu0 0
    %106 = vmatprep.subr.bf16.mxu0 0
    %107 = vmatpush1.bf16.msra.mxu0 0
    %108 = vmatprep.subr.bf16.mxu0 0
    %109 = vmatpush1.bf16.msra.mxu0 0
    %110 = vmatprep.mubr.bf16.mxu0 0
    %111 = vmatmul.mubr.bf16.gmra.mrb[0].mxu0 %v76
    %v112 = vpop.f32.mrb[0].mxu0
    %v113 = vadd.f32 %v55, %v112
    %v114 = vpop.f32.mrb[0].mxu0
    %v115 = vpop.f32.mrb[0].mxu0
    %v116 = vadd.f32 %v55, %v115
    %v117 = vpop.f32.mrb[0].mxu0
    %118 = vdwg.mxu0
    %v119 = vmul.f32 %v113, 0.5
    %v120 = vmul.f32 %v116, 0.5
    %v121 = vmul.f32 %v113, 0.70710677
    %v122 = vmul.f32 %v116, 0.70710677
    %v123 = verf.f32.pop %v121
    %v124 = verf.f32.pop %v122
    %v125 = vadd.f32 %v123, 1.0
    %v126 = vadd.f32 %v124, 1.0
    %v127 = vmul.f32 %v119, %v125
    %v128 = vmul.f32 %v120, %v126
    %129 = vst [vmem:[#allocation7] sm:$0xff] %v127
    %130 = vst [vmem:[#allocation7 + $0x8] sm:$0xff] %v128
    // Predicated region
    $region22: #{tpu_custom_call.1} parent=1 // pred_check
      _
    $region23: #{tpu_custom_call.1} parent=1 // pred_check_branch
      %132 = sbr.rel (0) target = $region25
    $region24: #{tpu_custom_call.1} parent=1 // pred_region
      %s134 = ssub.s32 256, 256
      %135 = vsyncadd [#allocation4], %s134
      %s136 = sshll.u32 [#allocation7], 4
      %s137 = int_to_ptr.vmem [resolvable:$true] %s136
      %142 = dma.vmem_to_hbm [thread:$0]  %s137, 256, %s3, [#allocation4], 128, 128, 8
    $region25: #{tpu_custom_call.1} parent=1 // pred_fallthru
      _
    // Predicated region
    $region26: #{tpu_custom_call.1} parent=1 // pred_check
      _
    $region27: #{tpu_custom_call.1} parent=1 // pred_check_branch
      %144 = sbr.rel (0) target = $region29
    $region28: #{tpu_custom_call.1} parent=1 // pred_region
      %145 = dma.done [#allocation4], 256
    $region29: #{tpu_custom_call.1} parent=1 // pred_fallthru
      _
    %146 = vsyncpa [#allocation3], 1
    %147 = vsyncpa [#allocation6], 1
    %148 = vsyncpa [#allocation4], 1

</llo_original>
